<compile_context>
chip_gen: v7x
topology: tpu7x:2x2x1
jax: 0.10.0
libtpu: 0.0.40
codegen_flags: <defaults>
</compile_context>

<pallas_src>
import functools

import jax
import jax.numpy as jnp
from jax.experimental import pallas as pl
from jax.experimental.pallas import tpu as pltpu

_NEG_MAX = float(-jnp.finfo(jnp.float32).max)  # torch's max_neg_value for fp32


def _flash_attn_kernel(*refs, scale, causal, tq, tk, has_mask):
    if has_mask:
        q_ref, k_ref, v_ref, mask_ref, o_ref, m_scr, l_scr, acc_scr = refs
    else:
        q_ref, k_ref, v_ref, o_ref, m_scr, l_scr, acc_scr = refs
        mask_ref = None

    qi = pl.program_id(1)
    kv = pl.program_id(2)

    @pl.when(kv == 0)
    def _init():
        m_scr[...] = jnp.full(m_scr.shape, -jnp.inf, dtype=m_scr.dtype)
        l_scr[...] = jnp.zeros(l_scr.shape, dtype=l_scr.dtype)
        acc_scr[...] = jnp.zeros(acc_scr.shape, dtype=acc_scr.dtype)

    def _update():
        # Fold the d**-0.5 scale into the small (tq, d) query tile (O(tq*d) VPU
        # work instead of O(tq*tk)).  Keep native dtype for full-rate MXU.
        q = q_ref[...] * scale
        k = k_ref[...]
        v = v_ref[...]

        # scores: (tq, tk), f32 accumulation on the MXU
        s = jax.lax.dot_general(
            q, k, (((1,), (1,)), ((), ())), preferred_element_type=jnp.float32
        )

        if mask_ref is not None:
            m = mask_ref[...]                       # (1, tk) or (tq, tk) int8
            s = jnp.where(m != 0, _NEG_MAX, s)

        if causal:
            row = qi * tq + jax.lax.broadcasted_iota(jnp.int32, s.shape, 0)
            col = kv * tk + jax.lax.broadcasted_iota(jnp.int32, s.shape, 1)
            s = jnp.where(col > row, _NEG_MAX, s)

        # Online softmax update (all lanes of m/l scratch hold identical values).
        m_prev = m_scr[...]                         # (tq, 128)
        l_prev = l_scr[...]                         # (tq, 128)
        m_cur = jnp.max(s, axis=-1, keepdims=True)  # (tq, 1)
        m_next = jnp.maximum(m_prev, m_cur)         # (tq, 128)
        alpha = jnp.exp(m_prev - m_next)            # (tq, 128)

        p = jnp.exp(s - m_next[:, :1])              # (tq, tk) f32
        l_scr[...] = alpha * l_prev + jnp.sum(p, axis=-1, keepdims=True)
        m_scr[...] = m_next

        pv = jax.lax.dot_general(
            p.astype(v.dtype), v, (((1,), (0,)), ((), ())),
            preferred_element_type=jnp.float32,
        )                                           # (tq, dv)
        acc_scr[...] = alpha[:, :1] * acc_scr[...] + pv

    if causal:
        # Skip kv tiles entirely above the causal diagonal for this query tile.
        @pl.when(kv * tk <= qi * tq + (tq - 1))
        def _():
            _update()
    else:
        _update()

    @pl.when(kv == pl.num_programs(2) - 1)
    def _finalize():
        l = l_scr[...][:, :1]                       # (tq, 1)
        inv = pl.reciprocal(l, approx=True)         # EUP slot, ~free
        o_ref[...] = (acc_scr[...] * inv).astype(o_ref.dtype)


def _pick_kv_tile(Lk, requested, has_mask):
    def ok(t):
        if t is None or t <= 0 or Lk % t:
            return False
        if t != Lk:
            if t % 8:                       # K/V sublane constraint
                return False
            if has_mask and t % 128:        # mask tile lane constraint
                return False
        return True

    if ok(requested):
        return requested
    for cand in (512, 256, 128):            # lane-dense defaults
        if ok(cand):
            return cand
    return Lk


def attention_no_cache(Q, K, V, mask=None, causal_masking=False,
                       q_chunk_size=None, kv_chunk_size=None):
    """Pallas equivalent of AttentionNoCache(activation=scaled softmax).forward."""
    assert not (causal_masking and mask is not None)
    B, Lq, d = Q.shape
    _, Lk, dv = V.shape
    assert K.shape == (B, Lk, d)

    tq = Lq
    if q_chunk_size is not None and q_chunk_size > 0 and Lq % q_chunk_size == 0:
        tq = q_chunk_size
    has_mask = mask is not None
    tk = _pick_kv_tile(Lk, kv_chunk_size, has_mask)

    scale = float(d) ** -0.5
    nq, nkv = Lq // tq, Lk // tk

    inputs = [Q, K, V]
    in_specs = [
        pl.BlockSpec((None, tq, d), lambda b, i, k: (b, i, 0)),
        pl.BlockSpec((None, tk, d), lambda b, i, k: (b, k, 0)),
        pl.BlockSpec((None, tk, dv), lambda b, i, k: (b, k, 0)),
    ]

    mask_q = 0
    if has_mask:
        # torch: mask.shape[-2] in {1, Lq}; keep it compact (int8, no Lq broadcast).
        mask_q = mask.shape[-2]
        assert mask_q in (1, Lq)
        mask_arr = jnp.broadcast_to(mask, (B, mask_q, Lk)).astype(jnp.int8)
        inputs.append(mask_arr)
        if mask_q == 1:
            in_specs.append(pl.BlockSpec((None, 1, tk), lambda b, i, k: (b, 0, k)))
        else:
            in_specs.append(pl.BlockSpec((None, tq, tk), lambda b, i, k: (b, i, k)))

    # Rough VMEM budget: double-buffered tiles + scratch; set the scoped limit
    # explicitly so large tiles still pipeline (and stay inside v7x's 64 MiB).
    def nbytes(dt):
        return jnp.dtype(dt).itemsize

    est = 2 * (tq * d * nbytes(Q.dtype) + tk * d * nbytes(K.dtype)
               + tk * dv * nbytes(V.dtype) + tq * dv * nbytes(Q.dtype))
    if has_mask:
        est += 2 * ((1 if mask_q == 1 else tq) * tk)
    est += (2 * tq * 128 + tq * dv) * 4
    vmem_limit = int(min(100 << 20, max(32 << 20, 2 * est)))

    kernel = functools.partial(
        _flash_attn_kernel, scale=scale, causal=causal_masking,
        tq=tq, tk=tk, has_mask=has_mask,
    )
    return pl.pallas_call(
        kernel,
        out_shape=jax.ShapeDtypeStruct((B, Lq, dv), Q.dtype),
        grid=(B, nq, nkv),
        in_specs=in_specs,
        out_specs=pl.BlockSpec((None, tq, dv), lambda b, i, k: (b, i, 0)),
        scratch_shapes=[
            pltpu.VMEM((tq, 128), jnp.float32),   # running row max (lane-broadcast)
            pltpu.VMEM((tq, 128), jnp.float32),   # running softmax denominator
            pltpu.VMEM((tq, dv), jnp.float32),    # unnormalized output accumulator
        ],
        compiler_params=pltpu.CompilerParams(
            dimension_semantics=("parallel", "parallel", "arbitrary"),
            vmem_limit_bytes=vmem_limit,
        ),
    )(*inputs)


def _reference(Q, K, V, mask=None, causal_masking=False):
    d = Q.shape[-1]
    dots = jnp.einsum("bqd,bkd->bqk", Q, K).astype(jnp.float32) * (float(d) ** -0.5)
    if mask is not None:
        dots = jnp.where(jnp.broadcast_to(mask, dots.shape), _NEG_MAX, dots)
    if causal_masking:
        Lq, Lk = dots.shape[-2], dots.shape[-1]
        cm = jnp.triu(jnp.ones((Lq, Lk), dtype=bool), k=1)
        dots = jnp.where(cm, _NEG_MAX, dots)
    attn = jax.nn.softmax(dots, axis=-1)
    return jnp.einsum("bqk,bkd->bqd", attn, V).astype(Q.dtype)


if __name__ == "__main__":
    key = jax.random.PRNGKey(0)
    kq, kk, kv_, km = jax.random.split(key, 4)

    # 1) plain attention, 2 query tiles x 2 kv tiles (online softmax exercised)
    B, Lq, Lk, d, dv = 2, 16, 16, 32, 32
    Q = jax.random.normal(kq, (B, Lq, d), dtype=jnp.float32)
    K = jax.random.normal(kk, (B, Lk, d), dtype=jnp.float32)
    V = jax.random.normal(kv_, (B, Lk, dv), dtype=jnp.float32)

    out = attention_no_cache(Q, K, V, q_chunk_size=8, kv_chunk_size=8)
    jax.block_until_ready(out)
    ref = _reference(Q, K, V)
    assert jnp.allclose(out, ref, atol=1e-2, rtol=1e-2), "plain attention mismatch"

    # 2) broadcastable boolean mask, longer key axis (2 lane-dense kv tiles)
    Lk2 = 256
    K2 = jax.random.normal(kk, (B, Lk2, d), dtype=jnp.float32)
    V2 = jax.random.normal(kv_, (B, Lk2, dv), dtype=jnp.float32)
    mask = jax.random.bernoulli(km, 0.2, (B, 1, Lk2))
    out_m = attention_no_cache(Q, K2, V2, mask=mask,
                               q_chunk_size=8, kv_chunk_size=128)
    jax.block_until_ready(out_m)
    ref_m = _reference(Q, K2, V2, mask=mask)
    assert jnp.allclose(out_m, ref_m, atol=1e-2, rtol=1e-2), "masked attention mismatch"

    # 3) causal masking (Lq == Lk), above-diagonal kv-tile skipping exercised
    out_c = attention_no_cache(Q, K, V, causal_masking=True,
                               q_chunk_size=8, kv_chunk_size=8)
    jax.block_until_ready(out_c)
    ref_c = _reference(Q, K, V, causal_masking=True)
    assert jnp.allclose(out_c, ref_c, atol=1e-2, rtol=1e-2), "causal attention mismatch"

    print("KERNEL_OK")
</pallas_src>

<mosaic_0001>
module attributes {stable_mosaic.version = 11 : i64} {
  func.func @_flash_attn_kernel(%arg0: i32, %arg1: i32, %arg2: i32, %arg3: memref<1x8x32xf32, #tpu.memory_space<vmem>>, %arg4: memref<1x8x32xf32, #tpu.memory_space<vmem>>, %arg5: memref<1x8x32xf32, #tpu.memory_space<vmem>>, %arg6: memref<1x8x32xf32, #tpu.memory_space<vmem>>, %arg7: memref<8x128xf32, #tpu.memory_space<vmem>>, %arg8: memref<8x128xf32, #tpu.memory_space<vmem>>, %arg9: memref<8x32xf32, #tpu.memory_space<vmem>>) attributes {dimension_semantics = [#tpu.dimension_semantics<parallel>, #tpu.dimension_semantics<parallel>, #tpu.dimension_semantics<arbitrary>], iteration_bounds = array<i64: 2, 2, 2>, scalar_prefetch = 0 : i64, scratch_operands = 3 : i64, tpu.core_type = #tpu.core_type<tc>, window_params = [{transform_indices = @transform_0, window_bounds = array<i64: 1, 8, 32>}, {transform_indices = @transform_1, window_bounds = array<i64: 1, 8, 32>}, {transform_indices = @transform_2, window_bounds = array<i64: 1, 8, 32>}, {transform_indices = @transform_3, window_bounds = array<i64: 1, 8, 32>}]} {
    %c0_i32 = arith.constant 0 : i32
    %0 = arith.cmpi eq, %arg2, %c0_i32 : i32
    %1 = arith.extui %0 : i1 to i32
    %c0_i32_0 = arith.constant 0 : i32
    %2 = arith.cmpi ne, %1, %c0_i32_0 : i32
    scf.if %2 {
      %cst_26 = arith.constant 0xFF800000 : f32
      %41 = vector.broadcast %cst_26 : f32 to vector<8x128xf32>
      %c0_27 = arith.constant 0 : index
      %c0_28 = arith.constant 0 : index
      %42 = vector.load %arg7[%c0_27, %c0_28] : memref<8x128xf32, #tpu.memory_space<vmem>>, vector<8x128xf32>
      tpu.vector_store %arg7[%c0_27, %c0_28], %41 {strides = array<i32>} : memref<8x128xf32, #tpu.memory_space<vmem>>, vector<8x128xf32>,
      %cst_29 = arith.constant 0.000000e+00 : f32
      %43 = vector.broadcast %cst_29 : f32 to vector<8x128xf32>
      %c0_30 = arith.constant 0 : index
      %c0_31 = arith.constant 0 : index
      %44 = vector.load %arg8[%c0_30, %c0_31] : memref<8x128xf32, #tpu.memory_space<vmem>>, vector<8x128xf32>
      tpu.vector_store %arg8[%c0_30, %c0_31], %43 {strides = array<i32>} : memref<8x128xf32, #tpu.memory_space<vmem>>, vector<8x128xf32>,
      %cst_32 = arith.constant 0.000000e+00 : f32
      %45 = vector.broadcast %cst_32 : f32 to vector<8x32xf32>
      %c0_33 = arith.constant 0 : index
      %c0_34 = arith.constant 0 : index
      %46 = vector.load %arg9[%c0_33, %c0_34] : memref<8x32xf32, #tpu.memory_space<vmem>>, vector<8x32xf32>
      tpu.vector_store %arg9[%c0_33, %c0_34], %45 {strides = array<i32>} : memref<8x32xf32, #tpu.memory_space<vmem>>, vector<8x32xf32>,
    } else {
    }
    %c0 = arith.constant 0 : index
    %c0_1 = arith.constant 0 : index
    %c0_2 = arith.constant 0 : index
    %3 = vector.load %arg3[%c0, %c0_1, %c0_2] : memref<1x8x32xf32, #tpu.memory_space<vmem>>, vector<1x8x32xf32>
    %4 = vector.shape_cast %3 : vector<1x8x32xf32> to vector<8x32xf32>
    %cst = arith.constant 0.176776692 : f32
    %5 = vector.broadcast %cst : f32 to vector<8x32xf32>
    %6 = arith.mulf %4, %5 : vector<8x32xf32>
    %c0_3 = arith.constant 0 : index
    %c0_4 = arith.constant 0 : index
    %c0_5 = arith.constant 0 : index
    %7 = vector.load %arg4[%c0_3, %c0_4, %c0_5] : memref<1x8x32xf32, #tpu.memory_space<vmem>>, vector<1x8x32xf32>
    %8 = vector.shape_cast %7 : vector<1x8x32xf32> to vector<8x32xf32>
    %c0_6 = arith.constant 0 : index
    %c0_7 = arith.constant 0 : index
    %c0_8 = arith.constant 0 : index
    %9 = vector.load %arg5[%c0_6, %c0_7, %c0_8] : memref<1x8x32xf32, #tpu.memory_space<vmem>>, vector<1x8x32xf32>
    %10 = vector.shape_cast %9 : vector<1x8x32xf32> to vector<8x32xf32>
    %cst_9 = arith.constant dense<0.000000e+00> : vector<8x8xf32>
    %11 = tpu.matmul %6, %8, %cst_9 {dimension_numbers = #tpu.dot_dimension_numbers<[1], [1], [0], [0], [0, 0, 1, 0], [], []>} : vector<8x32xf32>, vector<8x32xf32>, vector<8x8xf32> -> vector<8x8xf32>
    %c0_10 = arith.constant 0 : index
    %c0_11 = arith.constant 0 : index
    %12 = vector.load %arg7[%c0_10, %c0_11] : memref<8x128xf32, #tpu.memory_space<vmem>>, vector<8x128xf32>
    %c0_12 = arith.constant 0 : index
    %c0_13 = arith.constant 0 : index
    %13 = vector.load %arg8[%c0_12, %c0_13] : memref<8x128xf32, #tpu.memory_space<vmem>>, vector<8x128xf32>
    %cst_14 = arith.constant dense<0xFF800000> : vector<8xf32>
    %14 = vector.multi_reduction <maximumf>, %11, %cst_14 [1] : vector<8x8xf32> to vector<8xf32>
    %15 = vector.shape_cast %14 : vector<8xf32> to vector<8x1xf32>
    %16 = vector.broadcast %15 : vector<8x1xf32> to vector<8x128xf32>
    %17 = arith.maximumf %12, %16 : vector<8x128xf32>
    %18 = arith.subf %12, %17 : vector<8x128xf32>
    %19 = math.exp %18 : vector<8x128xf32>
    %20 = vector.extract_strided_slice %17 {offsets = [0, 0], sizes = [8, 1], strides = [1, 1]} : vector<8x128xf32> to vector<8x1xf32>
    %21 = vector.broadcast %20 : vector<8x1xf32> to vector<8x8xf32>
    %22 = arith.subf %11, %21 : vector<8x8xf32>
    %23 = math.exp %22 : vector<8x8xf32>
    %24 = arith.mulf %19, %13 : vector<8x128xf32>
    %cst_15 = arith.constant dense<0.000000e+00> : vector<8xf32>
    %25 = vector.multi_reduction <add>, %23, %cst_15 [1] : vector<8x8xf32> to vector<8xf32>
    %26 = vector.shape_cast %25 : vector<8xf32> to vector<8x1xf32>
    %27 = vector.broadcast %26 : vector<8x1xf32> to vector<8x128xf32>
    %28 = arith.addf %24, %27 : vector<8x128xf32>
    %c0_16 = arith.constant 0 : index
    %c0_17 = arith.constant 0 : index
    %29 = vector.load %arg8[%c0_16, %c0_17] : memref<8x128xf32, #tpu.memory_space<vmem>>, vector<8x128xf32>
    tpu.vector_store %arg8[%c0_16, %c0_17], %28 {strides = array<i32>} : memref<8x128xf32, #tpu.memory_space<vmem>>, vector<8x128xf32>,
    %c0_18 = arith.constant 0 : index
    %c0_19 = arith.constant 0 : index
    %30 = vector.load %arg7[%c0_18, %c0_19] : memref<8x128xf32, #tpu.memory_space<vmem>>, vector<8x128xf32>
    tpu.vector_store %arg7[%c0_18, %c0_19], %17 {strides = array<i32>} : memref<8x128xf32, #tpu.memory_space<vmem>>, vector<8x128xf32>,
    %cst_20 = arith.constant dense<0.000000e+00> : vector<8x32xf32>
    %31 = tpu.matmul %23, %10, %cst_20 {dimension_numbers = #tpu.dot_dimension_numbers<[1], [0], [0], [1], [0, 0, 1, 1], [], []>} : vector<8x8xf32>, vector<8x32xf32>, vector<8x32xf32> -> vector<8x32xf32>
    %32 = vector.extract_strided_slice %19 {offsets = [0, 0], sizes = [8, 1], strides = [1, 1]} : vector<8x128xf32> to vector<8x1xf32>
    %c0_21 = arith.constant 0 : index
    %c0_22 = arith.constant 0 : index
    %33 = vector.load %arg9[%c0_21, %c0_22] : memref<8x32xf32, #tpu.memory_space<vmem>>, vector<8x32xf32>
    %34 = vector.broadcast %32 : vector<8x1xf32> to vector<8x32xf32>
    %35 = arith.mulf %34, %33 : vector<8x32xf32>
    %36 = arith.addf %35, %31 : vector<8x32xf32>
    %c0_23 = arith.constant 0 : index
    %c0_24 = arith.constant 0 : index
    %37 = vector.load %arg9[%c0_23, %c0_24] : memref<8x32xf32, #tpu.memory_space<vmem>>, vector<8x32xf32>
    tpu.vector_store %arg9[%c0_23, %c0_24], %36 {strides = array<i32>} : memref<8x32xf32, #tpu.memory_space<vmem>>, vector<8x32xf32>,
    %c1_i32 = arith.constant 1 : i32
    %38 = arith.cmpi eq, %arg2, %c1_i32 : i32
    %39 = arith.extui %38 : i1 to i32
    %c0_i32_25 = arith.constant 0 : i32
    %40 = arith.cmpi ne, %39, %c0_i32_25 : i32
    scf.if %40 {
      %c0_26 = arith.constant 0 : index
      %c0_27 = arith.constant 0 : index
      %41 = vector.load %arg8[%c0_26, %c0_27] : memref<8x128xf32, #tpu.memory_space<vmem>>, vector<8x128xf32>
      %42 = vector.extract_strided_slice %41 {offsets = [0, 0], sizes = [8, 1], strides = [1, 1]} : vector<8x128xf32> to vector<8x1xf32>
      %43 = tpu.reciprocal %42 {approx = true} : vector<8x1xf32> -> vector<8x1xf32>
      %c0_28 = arith.constant 0 : index
      %c0_29 = arith.constant 0 : index
      %44 = vector.load %arg9[%c0_28, %c0_29] : memref<8x32xf32, #tpu.memory_space<vmem>>, vector<8x32xf32>
      %45 = vector.broadcast %43 : vector<8x1xf32> to vector<8x32xf32>
      %46 = arith.mulf %44, %45 : vector<8x32xf32>
      %c0_30 = arith.constant 0 : index
      %c0_31 = arith.constant 0 : index
      %c0_32 = arith.constant 0 : index
      %47 = vector.load %arg6[%c0_30, %c0_31, %c0_32] : memref<1x8x32xf32, #tpu.memory_space<vmem>>, vector<1x8x32xf32>
      %48 = vector.shape_cast %47 : vector<1x8x32xf32> to vector<8x32xf32>
      %49 = vector.shape_cast %46 : vector<8x32xf32> to vector<1x8x32xf32>
      tpu.vector_store %arg6[%c0_30, %c0_31, %c0_32], %49 {strides = array<i32>} : memref<1x8x32xf32, #tpu.memory_space<vmem>>, vector<1x8x32xf32>,
    } else {
    }
    return
  }
  func.func @transform_0(%arg0: i32, %arg1: i32, %arg2: i32) -> (i32, i32, i32) {
    %c0_i32 = arith.constant 0 : i32
    %c0_i32_0 = arith.constant 0 : i32
    return %arg0, %arg1, %c0_i32 : i32, i32, i32
  }
  func.func @transform_1(%arg0: i32, %arg1: i32, %arg2: i32) -> (i32, i32, i32) {
    %c0_i32 = arith.constant 0 : i32
    %c0_i32_0 = arith.constant 0 : i32
    return %arg0, %arg2, %c0_i32 : i32, i32, i32
  }
  func.func @transform_2(%arg0: i32, %arg1: i32, %arg2: i32) -> (i32, i32, i32) {
    %c0_i32 = arith.constant 0 : i32
    %c0_i32_0 = arith.constant 0 : i32
    return %arg0, %arg2, %c0_i32 : i32, i32, i32
  }
  func.func @transform_3(%arg0: i32, %arg1: i32, %arg2: i32) -> (i32, i32, i32) {
    %c0_i32 = arith.constant 0 : i32
    %c0_i32_0 = arith.constant 0 : i32
    return %arg0, %arg1, %c0_i32 : i32, i32, i32
  }
}

</mosaic_0001>

<llo_original>
// kernel: tpu_custom_call.1
$region0: #{tpu_custom_call.1}
  #allocation0 [shape = 'u32[]', space=smem, size = 0x4, offset = 0x4, fixed_abs, tag = 'smem constant byte address 0x4 - core index']
  #allocation1 [shape = 'u32[144,128]{1,0:T(1,128)}', space=vmem, size = 0x12000, scoped, tag = 'internal scratch']
  #allocation2 [shape = 'f32[8,128]{1,0:T(8,128)}', space=vmem, size = 0x1000, scoped, tag = 'scratch operand']
  #allocation3 [shape = 'f32[8,128]{1,0:T(8,128)}', space=vmem, size = 0x1000, scoped, tag = 'scratch operand']
  #allocation4 [shape = 'f32[8,32]{1,0:T(8,128)}', space=vmem, size = 0x1000, scoped, tag = 'scratch operand']
  %s0 = inlined_call_operand.hbm [shape: f32[2,16,32], index: 0, kind: input, shape index: {}]
  %s1 = inlined_call_operand.hbm [shape: f32[2,16,32], index: 1, kind: input, shape index: {}]
  %s2 = inlined_call_operand.hbm [shape: f32[2,16,32], index: 2, kind: input, shape index: {}]
  %s3 = inlined_call_operand.hbm [shape: f32[2,16,32], index: 3, kind: output, shape index: {}]
  %s4 = sld [smem:[#allocation0]]
  $region65: #{tpu_custom_call.1} parent=0
    _
  %s6 = ssub.s32 1, %s4
  %s7 = scalar_select 0, %s6, %s4
  $region1: #{tpu_custom_call.1} parent=0
    #allocation5 [shape = 'u8[8192]{0}', space=vmem, size = 0x2000, scoped, tag = 'input window, operand 0']
    #allocation6 [shape = 's32[2]{0}', space=sflag, size = 0x8, scoped, tag = 'scoped memory for tpu_custom_call.1']
    #allocation7 [shape = 's32[2]{0}', space=sflag, size = 0x8, scoped, tag = 'scoped memory for tpu_custom_call.1']
    #allocation8 [shape = 'u8[8192]{0}', space=vmem, size = 0x2000, scoped, tag = 'input window, operand 1']
    #allocation9 [shape = 's32[2]{0}', space=sflag, size = 0x8, scoped, tag = 'scoped memory for tpu_custom_call.1']
    #allocation10 [shape = 'u8[8192]{0}', space=vmem, size = 0x2000, scoped, tag = 'input window, operand 2']
    #allocation11 [shape = 'u8[8192]{0}', space=vmem, size = 0x2000, scoped, tag = 'output window, operand 0']
    %8 = vsyncpa [#allocation6], 0
    %s9 = scalar_lea.sflag [#allocation6], 1
    %10 = vsyncpa %s9, 0
    %11 = vsyncpa [#allocation9], 0
    %s12 = scalar_lea.sflag [#allocation9], 1
    %13 = vsyncpa %s12, 0
    %14 = vsyncpa [#allocation7], 0
    %s15 = scalar_lea.sflag [#allocation7], 1
    %16 = vsyncpa %s15, 0
    loop: start=0, step=1, limit=10
    $region2: #{tpu_custom_call.1} parent=1 // loop_pre_header
      _
    $region3: #{tpu_custom_call.1} parent=1 // loop_header
      %s18 = sphi 0, %s22
      %p19 = scmp.ge.s32.totalorder %s18, 10
      %s25 = sphi 0, %s44
      %s26 = sphi 0, %s40
      %s27 = sphi 0, %s36
      %s28 = sphi 0, %s25
      %s29 = sphi 0, %s26
      %s30 = sphi 0, %s27
      %s31 = sphi 0, %s28
      %s32 = sphi 0, %s29
      %s33 = sphi 0, %s30
      %s49 = sphi 0, %s51
      %s52 = sphi 0, %s49
      %s53 = sphi 0, %s52
      %s69 = sphi 0, %s53
      %s77 = sphi 0, %s79
      %s80 = sphi 0, %s77
      %s81 = sphi 0, %s80
      %s97 = sphi 0, %s81
      %s105 = sphi 0, %s107
      %s108 = sphi 0, %s105
      %s109 = sphi 0, %s108
      %s125 = sphi 0, %s109
      %s133 = sphi 0, %s135
      %s136 = sphi 0, %s133
      %s137 = sphi 0, %s136
      %s153 = sphi 0, %s137
    $region4: #{tpu_custom_call.1} parent=1 // loop_header_branch
      %21 = sbr.rel (%p19) target = $region8
    $region5: #{tpu_custom_call.1} parent=1 // loop_body
      %s23 = ssub.s32 %s18, 1
      %s24 = ssub.s32 %s18, 2
      %s34 = sadd.s32 1, %s27
      %p35 = scmp.ge.s32.totalorder %s34, 2
      %s36 = scalar_select %p35, 0, %s34
      %s37 = sadd.s32 1, %s26
      %s38 = scalar_select %p35, %s37, %s26
      %p39 = scmp.ge.s32.totalorder %s38, 2
      %s40 = scalar_select %p39, 0, %s38
      %s41 = sadd.s32 1, %s25
      %s42 = scalar_select %p39, %s41, %s25
      %p43 = scmp.ge.s32.totalorder %s42, 2
      %s44 = scalar_select %p43, 0, %s42
      %s45 = ssub.s32 %s25, %s44
      %s46 = ssub.s32 %s26, %s40
      %s47 = sor.u32 %s45, %s46
      %p48 = scmp.eq.s32.totalorder %s47, 0
      %s50 = sadd.s32 %s49, 1
      %s51 = scalar_select %p48, %s49, %s50
      %p54 = pneg %p48
      %p55 = scmp.eq.s32.totalorder %s18, 7
      %p56 = por %p54, %p55
      %p57 = scmp.ne.s32.totalorder %s49, %s52
      %p58 = scmp.eq.s32.totalorder %s18, 0
      %p59 = por %p57, %p58
      %p60 = scmp.ne.s32.totalorder %s49, %s52
      %p61 = scmp.eq.s32.totalorder %s23, 7
      %p62 = por %p60, %p61
      %p63 = scmp.ne.s32.totalorder %s52, %s53
      %p64 = scmp.eq.s32.totalorder %s23, 0
      %p65 = por %p63, %p64
      %p66 = scmp.ne.s32.totalorder %s52, %s53
      %p67 = scmp.eq.s32.totalorder %s24, 7
      %p68 = por %p66, %p67
      %p70 = scmp.ne.s32.totalorder %s53, %s69
      %p71 = scmp.eq.s32.totalorder %s24, 0
      %p72 = por %p70, %p71
      %s73 = ssub.s32 %s25, %s44
      %s74 = ssub.s32 %s27, %s36
      %s75 = sor.u32 %s73, %s74
      %p76 = scmp.eq.s32.totalorder %s75, 0
      %s78 = sadd.s32 %s77, 1
      %s79 = scalar_select %p76, %s77, %s78
      %p82 = pneg %p76
      %p83 = scmp.eq.s32.totalorder %s18, 7
      %p84 = por %p82, %p83
      %p85 = scmp.ne.s32.totalorder %s77, %s80
      %p86 = scmp.eq.s32.totalorder %s18, 0
      %p87 = por %p85, %p86
      %p88 = scmp.ne.s32.totalorder %s77, %s80
      %p89 = scmp.eq.s32.totalorder %s23, 7
      %p90 = por %p88, %p89
      %p91 = scmp.ne.s32.totalorder %s80, %s81
      %p92 = scmp.eq.s32.totalorder %s23, 0
      %p93 = por %p91, %p92
      %p94 = scmp.ne.s32.totalorder %s80, %s81
      %p95 = scmp.eq.s32.totalorder %s24, 7
      %p96 = por %p94, %p95
      %p98 = scmp.ne.s32.totalorder %s81, %s97
      %p99 = scmp.eq.s32.totalorder %s24, 0
      %p100 = por %p98, %p99
      %s101 = ssub.s32 %s25, %s44
      %s102 = ssub.s32 %s27, %s36
      %s103 = sor.u32 %s101, %s102
      %p104 = scmp.eq.s32.totalorder %s103, 0
      %s106 = sadd.s32 %s105, 1
      %s107 = scalar_select %p104, %s105, %s106
      %p110 = pneg %p104
      %p111 = scmp.eq.s32.totalorder %s18, 7
      %p112 = por %p110, %p111
      %p113 = scmp.ne.s32.totalorder %s105, %s108
      %p114 = scmp.eq.s32.totalorder %s18, 0
      %p115 = por %p113, %p114
      %p116 = scmp.ne.s32.totalorder %s105, %s108
      %p117 = scmp.eq.s32.totalorder %s23, 7
      %p118 = por %p116, %p117
      %p119 = scmp.ne.s32.totalorder %s108, %s109
      %p120 = scmp.eq.s32.totalorder %s23, 0
      %p121 = por %p119, %p120
      %p122 = scmp.ne.s32.totalorder %s108, %s109
      %p123 = scmp.eq.s32.totalorder %s24, 7
      %p124 = por %p122, %p123
      %p126 = scmp.ne.s32.totalorder %s109, %s125
      %p127 = scmp.eq.s32.totalorder %s24, 0
      %p128 = por %p126, %p127
      %s129 = ssub.s32 %s25, %s44
      %s130 = ssub.s32 %s26, %s40
      %s131 = sor.u32 %s129, %s130
      %p132 = scmp.eq.s32.totalorder %s131, 0
      %s134 = sadd.s32 %s133, 1
      %s135 = scalar_select %p132, %s133, %s134
      %p138 = pneg %p132
      %p139 = scmp.eq.s32.totalorder %s18, 7
      %p140 = por %p138, %p139
      %p141 = scmp.ne.s32.totalorder %s133, %s136
      %p142 = scmp.eq.s32.totalorder %s18, 0
      %p143 = por %p141, %p142
      %p144 = scmp.ne.s32.totalorder %s133, %s136
      %p145 = scmp.eq.s32.totalorder %s23, 7
      %p146 = por %p144, %p145
      %p147 = scmp.ne.s32.totalorder %s136, %s137
      %p148 = scmp.eq.s32.totalorder %s23, 0
      %p149 = por %p147, %p148
      %p150 = scmp.ne.s32.totalorder %s136, %s137
      %p151 = scmp.eq.s32.totalorder %s24, 7
      %p152 = por %p150, %p151
      %p154 = scmp.ne.s32.totalorder %s137, %s153
      %p155 = scmp.eq.s32.totalorder %s24, 0
      %p156 = por %p154, %p155
      %p157 = scmp.le.s32.totalorder 1, %s18
      %p158 = scmp.lt.s32.totalorder %s18, 9
      %p159 = pnand %p157, %p158
      %p160 = pneg %p159
      // Predicated region
      $region9: #{tpu_custom_call.1} parent=5 // pred_check
        _
      $region10: #{tpu_custom_call.1} parent=5 // pred_check_branch
        %162 = sbr.rel (%p159) target = $region12
      $region11: #{tpu_custom_call.1} parent=5 // pred_region
        %s163 = ssub.s32 %s18, 1
      $region12: #{tpu_custom_call.1} parent=5 // pred_fallthru
        _
      %p164 = scmp.lt.s32.totalorder %s18, 8
      // Predicated region
      $region13: #{tpu_custom_call.1} parent=5 // pred_check
        %p165 = pneg %p164
      $region14: #{tpu_custom_call.1} parent=5 // pred_check_branch
        %167 = sbr.rel (%p165) target = $region16
      $region15: #{tpu_custom_call.1} parent=5 // pred_region
        // Predicated region
        $region17: #{tpu_custom_call.1} parent=15 // pred_check
          %p168 = pneg %p59
        $region18: #{tpu_custom_call.1} parent=15 // pred_check_branch
          %170 = sbr.rel (%p168) target = $region20
        $region19: #{tpu_custom_call.1} parent=15 // pred_region
          %s171 = sand.u32 %s49, 1
          %s172 = scalar_lea.sflag [#allocation6], %s171
          %s173 = sand.u32 %s49, 1
          %s174 = smul.addr %s173, 8
          %s175 = scalar_lea.vmem [#allocation5], %s174
          %s177 = ssub.s32 128, 128
          %178 = vsyncadd %s172, %s177
          %s179 = smul.addr %s25, 2
          %s180 = sadd.s32 %s26, %s179
          %s181 = smul.addr %s180, 128
          %s182 = scalar_lea.hbm %s0, %s181
          %s184 = sshll.u32 %s175, 4
          %s185 = int_to_ptr.vmem [resolvable:$true] %s184
          %187 = dma.hbm_to_vmem [thread:$0]  %s182, 128, %s185, %s172
        $region20: #{tpu_custom_call.1} parent=15 // pred_fallthru
          _
        // Predicated region
        $region21: #{tpu_custom_call.1} parent=15 // pred_check
          %p188 = pneg %p87
        $region22: #{tpu_custom_call.1} parent=15 // pred_check_branch
          %190 = sbr.rel (%p188) target = $region24
        $region23: #{tpu_custom_call.1} parent=15 // pred_region
          %s191 = sand.u32 %s18, 1
          %s192 = scalar_lea.sflag [#allocation9], %s191
          %s193 = sand.u32 %s77, 1
          %s194 = smul.addr %s193, 8
          %s195 = scalar_lea.vmem [#allocation8], %s194
          %s197 = ssub.s32 128, 128
          %198 = vsyncadd %s192, %s197
          %s199 = smul.addr %s25, 2
          %s200 = sadd.s32 %s27, %s199
          %s201 = smul.addr %s200, 128
          %s202 = scalar_lea.hbm %s1, %s201
          %s204 = sshll.u32 %s195, 4
          %s205 = int_to_ptr.vmem [resolvable:$true] %s204
          %207 = dma.hbm_to_vmem [thread:$0]  %s202, 128, %s205, %s192
        $region24: #{tpu_custom_call.1} parent=15 // pred_fallthru
          _
        // Predicated region
        $region25: #{tpu_custom_call.1} parent=15 // pred_check
          %p208 = pneg %p115
        $region26: #{tpu_custom_call.1} parent=15 // pred_check_branch
          %210 = sbr.rel (%p208) target = $region28
        $region27: #{tpu_custom_call.1} parent=15 // pred_region
          %s211 = sand.u32 %s18, 1
          %s212 = scalar_lea.sflag [#allocation9], %s211
          %s213 = sand.u32 %s105, 1
          %s214 = smul.addr %s213, 8
          %s215 = scalar_lea.vmem [#allocation10], %s214
          %s217 = ssub.s32 128, 128
          %218 = vsyncadd %s212, %s217
          %s219 = smul.addr %s25, 2
          %s220 = sadd.s32 %s27, %s219
          %s221 = smul.addr %s220, 128
          %s222 = scalar_lea.hbm %s2, %s221
          %s224 = sshll.u32 %s215, 4
          %s225 = int_to_ptr.vmem [resolvable:$true] %s224
          %227 = dma.hbm_to_vmem [thread:$0]  %s222, 128, %s225, %s212
        $region28: #{tpu_custom_call.1} parent=15 // pred_fallthru
          _
      $region16: #{tpu_custom_call.1} parent=5 // pred_fallthru
        _
      %p228 = scmp.le.s32.totalorder 1, %s18
      %p229 = scmp.lt.s32.totalorder %s18, 9
      %p230 = pnand %p228, %p229
      %p231 = pneg %p230
      // Predicated region
      $region29: #{tpu_custom_call.1} parent=5 // pred_check
        _
      $region30: #{tpu_custom_call.1} parent=5 // pred_check_branch
        %233 = sbr.rel (%p230) target = $region32
      $region31: #{tpu_custom_call.1} parent=5 // pred_region
        %s234 = ssub.s32 %s18, 1
        %s235 = sand.u32 %s52, 1
        %s236 = scalar_lea.sflag [#allocation6], %s235
        %s237 = sand.u32 %s52, 1
        %s238 = smul.addr %s237, 8
        %s239 = scalar_lea.vmem [#allocation5], %s238
        // Predicated region
        $region33: #{tpu_custom_call.1} parent=31 // pred_check
          %p240 = pneg %p65
        $region34: #{tpu_custom_call.1} parent=31 // pred_check_branch
          %242 = sbr.rel (%p240) target = $region36
        $region35: #{tpu_custom_call.1} parent=31 // pred_region
          %243 = dma.done %s236, 128
        $region36: #{tpu_custom_call.1} parent=31 // pred_fallthru
          _
        %s244 = sand.u32 %s23, 1
        %s245 = scalar_lea.sflag [#allocation9], %s244
        %s246 = sand.u32 %s80, 1
        %s247 = smul.addr %s246, 8
        %s248 = scalar_lea.vmem [#allocation8], %s247
        // Predicated region
        $region37: #{tpu_custom_call.1} parent=31 // pred_check
          %p249 = pneg %p93
        $region38: #{tpu_custom_call.1} parent=31 // pred_check_branch
          %251 = sbr.rel (%p249) target = $region40
        $region39: #{tpu_custom_call.1} parent=31 // pred_region
          %252 = dma.done %s245, 128
        $region40: #{tpu_custom_call.1} parent=31 // pred_fallthru
          _
        %s253 = sand.u32 %s23, 1
        %s254 = scalar_lea.sflag [#allocation9], %s253
        %s255 = sand.u32 %s108, 1
        %s256 = smul.addr %s255, 8
        %s257 = scalar_lea.vmem [#allocation10], %s256
        // Predicated region
        $region41: #{tpu_custom_call.1} parent=31 // pred_check
          %p258 = pneg %p121
        $region42: #{tpu_custom_call.1} parent=31 // pred_check_branch
          %260 = sbr.rel (%p258) target = $region44
        $region43: #{tpu_custom_call.1} parent=31 // pred_region
          %261 = dma.done %s254, 128
        $region44: #{tpu_custom_call.1} parent=31 // pred_fallthru
          _
        %s262 = sand.u32 %s52, 1
        %s263 = scalar_lea.sflag [#allocation6], %s262
        %s264 = sand.u32 %s52, 1
        %s265 = smul.addr %s264, 8
        %s266 = scalar_lea.vmem [#allocation5], %s265
        %p267 = pneg %p65
        %p268 = pneg %p62
        %s269 = sand.u32 %s23, 1
        %s270 = scalar_lea.sflag [#allocation9], %s269
        %s271 = sand.u32 %s80, 1
        %s272 = smul.addr %s271, 8
        %s273 = scalar_lea.vmem [#allocation8], %s272
        %p274 = pneg %p93
        %p275 = pneg %p90
        %s276 = sand.u32 %s23, 1
        %s277 = scalar_lea.sflag [#allocation9], %s276
        %s278 = sand.u32 %s108, 1
        %s279 = smul.addr %s278, 8
        %s280 = scalar_lea.vmem [#allocation10], %s279
        %p281 = pneg %p121
        %p282 = pneg %p118
        %p283 = pneg %p149
        %p284 = pneg %p146
        %s285 = sand.u32 %s136, 1
        %s286 = scalar_lea.sflag [#allocation7], %s285
        %s287 = sand.u32 %s136, 1
        %s288 = smul.addr %s287, 8
        %s289 = scalar_lea.vmem [#allocation11], %s288
        %p290 = scmp.eq.s32.totalorder %s30, 0
        // Predicated region
        $region45: #{tpu_custom_call.1} parent=31 // pred_check
          %p291 = pneg %p290
        $region46: #{tpu_custom_call.1} parent=31 // pred_check_branch
          %293 = sbr.rel (%p291) target = $region48
        $region47: #{tpu_custom_call.1} parent=31 // pred_region
          %294 = vst [vmem:[#allocation2] sm:$0xff] -inf
          %295 = vst [vmem:[#allocation3] sm:$0xff] 0.0
          %vm296 = vcmask 261120
          %297 = vst.msk [vmem:[#allocation4] sm:$0xff] %vm296, 0.0
        $region48: #{tpu_custom_call.1} parent=31 // pred_fallthru
          _
        %v298 = vld [vmem:[%s239] sm:$0xff]
        %v299 = vmul.f32 %v298, 0.17677669
        %v300 = vld [vmem:[%s248] sm:$0xff]
        %v301 = vld [vmem:[%s257] sm:$0xff]
        %vm302 = vcmask 261120
        %v304 = vsel %vm302, %v299, 0
        %v307 = vsel %vm302, %v300, 0
        %309 = vmatprep.subr.mxu0 0.0
        %310 = vmatpush1.xpose.msra.mxu0 %v307
        %311 = vmatprep.subr.mxu0 0.0
        %312 = vmatpush1.xpose.msra.mxu0 0.0
        %313 = vmatprep.subr.mxu0 0.0
        %314 = vmatpush1.xpose.msra.mxu0 0.0
        %315 = vmatprep.subr.mxu0 0.0
        %316 = vmatpush1.xpose.msra.mxu0 0.0
        %317 = vmatprep.subr.mxu0 0.0
        %318 = vmatpush1.xpose.msra.mxu0 0.0
        %319 = vmatprep.subr.mxu0 0.0
        %320 = vmatpush1.xpose.msra.mxu0 0.0
        %321 = vmatprep.subr.mxu0 0.0
        %322 = vmatpush1.xpose.msra.mxu0 0.0
        %323 = vmatprep.subr.mxu0 0.0
        %324 = vmatpush1.xpose.msra.mxu0 0.0
        %325 = vmatprep.subr.mxu0 0.0
        %326 = vmatpush1.xpose.msra.mxu0 0.0
        %327 = vmatprep.subr.mxu0 0.0
        %328 = vmatpush1.xpose.msra.mxu0 0.0
        %329 = vmatprep.subr.mxu0 0.0
        %330 = vmatpush1.xpose.msra.mxu0 0.0
        %331 = vmatprep.subr.mxu0 0.0
        %332 = vmatpush1.xpose.msra.mxu0 0.0
        %333 = vmatprep.subr.mxu0 0.0
        %334 = vmatpush1.xpose.msra.mxu0 0.0
        %335 = vmatprep.subr.mxu0 0.0
        %336 = vmatpush1.xpose.msra.mxu0 0.0
        %337 = vmatprep.subr.mxu0 0.0
        %338 = vmatpush1.xpose.msra.mxu0 0.0
        %339 = vmatprep.subr.mxu0 0.0
        %340 = vmatpush1.xpose.msra.mxu0 0.0
        %341 = vmatprep.subr.mxu0 0.0
        %342 = vmatpush1.xpose.msra.mxu0 0.0
        %343 = vmatprep.subr.mxu0 0.0
        %344 = vmatpush1.xpose.msra.mxu0 0.0
        %345 = vmatprep.subr.mxu0 0.0
        %346 = vmatpush1.xpose.msra.mxu0 0.0
        %347 = vmatprep.subr.mxu0 0.0
        %348 = vmatpush1.xpose.msra.mxu0 0.0
        %349 = vmatprep.subr.mxu0 0.0
        %350 = vmatpush1.xpose.msra.mxu0 0.0
        %351 = vmatprep.subr.mxu0 0.0
        %352 = vmatpush1.xpose.msra.mxu0 0.0
        %353 = vmatprep.subr.mxu0 0.0
        %354 = vmatpush1.xpose.msra.mxu0 0.0
        %355 = vmatprep.subr.mxu0 0.0
        %356 = vmatpush1.xpose.msra.mxu0 0.0
        %357 = vmatprep.subr.mxu0 0.0
        %358 = vmatpush1.xpose.msra.mxu0 0.0
        %359 = vmatprep.subr.mxu0 0.0
        %360 = vmatpush1.xpose.msra.mxu0 0.0
        %361 = vmatprep.subr.mxu0 0.0
        %362 = vmatpush1.xpose.msra.mxu0 0.0
        %363 = vmatprep.subr.mxu0 0.0
        %364 = vmatpush1.xpose.msra.mxu0 0.0
        %365 = vmatprep.subr.mxu0 0.0
        %366 = vmatpush1.xpose.msra.mxu0 0.0
        %367 = vmatprep.subr.mxu0 0.0
        %368 = vmatpush1.xpose.msra.mxu0 0.0
        %369 = vmatprep.subr.mxu0 0.0
        %370 = vmatpush1.xpose.msra.mxu0 0.0
        %371 = vmatprep.subr.mxu0 0.0
        %372 = vmatpush1.xpose.msra.mxu0 0.0
        %373 = vmatprep.mubr.f32.mxu0 0.0
        %374 = vmatmul.mubr.f32.gmra.mrb[0].mxu0 %v304
        %v375 = vpop.f32.mrb[0].mxu0
        %v376 = vadd.f32 0.0, %v375
        %v377 = vpop.f32.mrb[0].mxu0
        %378 = vdwg.mxu0
        %v379 = vld [vmem:[#allocation2] sm:$0xff]
        %v380 = vld [vmem:[#allocation3] sm:$0xff]
        %vm381 = vcmask 64512
        %v382 = vsel %vm381, %v376, -inf
        %383 = vmax.xlane.f32.xlu0 %v382
        %v384 = vpop.xlane.xlu0 %383
        %v385 = vmax.f32 %v379, %v384
        %v386 = vsub.f32 %v379, %v385
        %v387 = vmul.f32 %v386, 1.442695
        %v388 = vpow.pop %v387
        %390 = vset.pattern.permute.xlu0 0
        %391 = vperm.xlu0 %390, %v385
        %v392 = vpop.permute.xlu0 %391
        %v394 = vsub.f32 %v376, %v392
        %v395 = vmul.f32 %v394, 1.442695
        %v396 = vpow.pop %v395
        %v397 = vmul.f32 %v388, %v380
        %v398 = vsel %vm381, %v396, 0.0
        %399 = vadd.xlane.f32.xlu0 %v398
        %v400 = vpop.xlane.xlu0 %399
        %v401 = vadd.f32 %v397, %v400
        %402 = vst [vmem:[#allocation3] sm:$0xff] %v401
        %403 = vst [vmem:[#allocation2] sm:$0xff] %v385
        %v405 = vsel %vm381, %v396, 0
        %407 = vmatprep.subr.mxu0 0.0
        %408 = vmatpush1.msra.mxu0 %v301
        %409 = vmatprep.subr.mxu0 0.0
        %410 = vmatpush1.msra.mxu0 0.0
        %411 = vmatprep.subr.mxu0 0.0
        %412 = vmatpush1.msra.mxu0 0.0
        %413 = vmatprep.subr.mxu0 0.0
        %414 = vmatpush1.msra.mxu0 0.0
        %415 = vmatprep.subr.mxu0 0.0
        %416 = vmatpush1.msra.mxu0 0.0
        %417 = vmatprep.subr.mxu0 0.0
        %418 = vmatpush1.msra.mxu0 0.0
        %419 = vmatprep.subr.mxu0 0.0
        %420 = vmatpush1.msra.mxu0 0.0
        %421 = vmatprep.subr.mxu0 0.0
        %422 = vmatpush1.msra.mxu0 0.0
        %423 = vmatprep.subr.mxu0 0.0
        %424 = vmatpush1.msra.mxu0 0.0
        %425 = vmatprep.subr.mxu0 0.0
        %426 = vmatpush1.msra.mxu0 0.0
        %427 = vmatprep.subr.mxu0 0.0
        %428 = vmatpush1.msra.mxu0 0.0
        %429 = vmatprep.subr.mxu0 0.0
        %430 = vmatpush1.msra.mxu0 0.0
        %431 = vmatprep.subr.mxu0 0.0
        %432 = vmatpush1.msra.mxu0 0.0
        %433 = vmatprep.subr.mxu0 0.0
        %434 = vmatpush1.msra.mxu0 0.0
        %435 = vmatprep.subr.mxu0 0.0
        %436 = vmatpush1.msra.mxu0 0.0
        %437 = vmatprep.subr.mxu0 0.0
        %438 = vmatpush1.msra.mxu0 0.0
        %439 = vmatprep.subr.mxu0 0.0
        %440 = vmatpush1.msra.mxu0 0.0
        %441 = vmatprep.subr.mxu0 0.0
        %442 = vmatpush1.msra.mxu0 0.0
        %443 = vmatprep.subr.mxu0 0.0
        %444 = vmatpush1.msra.mxu0 0.0
        %445 = vmatprep.subr.mxu0 0.0
        %446 = vmatpush1.msra.mxu0 0.0
        %447 = vmatprep.subr.mxu0 0.0
        %448 = vmatpush1.msra.mxu0 0.0
        %449 = vmatprep.subr.mxu0 0.0
        %450 = vmatpush1.msra.mxu0 0.0
        %451 = vmatprep.subr.mxu0 0.0
        %452 = vmatpush1.msra.mxu0 0.0
        %453 = vmatprep.subr.mxu0 0.0
        %454 = vmatpush1.msra.mxu0 0.0
        %455 = vmatprep.subr.mxu0 0.0
        %456 = vmatpush1.msra.mxu0 0.0
        %457 = vmatprep.subr.mxu0 0.0
        %458 = vmatpush1.msra.mxu0 0.0
        %459 = vmatprep.subr.mxu0 0.0
        %460 = vmatpush1.msra.mxu0 0.0
        %461 = vmatprep.subr.mxu0 0.0
        %462 = vmatpush1.msra.mxu0 0.0
        %463 = vmatprep.subr.mxu0 0.0
        %464 = vmatpush1.msra.mxu0 0.0
        %465 = vmatprep.subr.mxu0 0.0
        %466 = vmatpush1.msra.mxu0 0.0
        %467 = vmatprep.subr.mxu0 0.0
        %468 = vmatpush1.msra.mxu0 0.0
        %469 = vmatprep.subr.mxu0 0.0
        %470 = vmatpush1.msra.mxu0 0.0
        %471 = vmatprep.mubr.f32.mxu0 0.0
        %472 = vmatmul.mubr.f32.gmra.mrb[0].mxu0 %v405
        %v473 = vpop.f32.mrb[0].mxu0
        %v474 = vadd.f32 0.0, %v473
        %v475 = vpop.f32.mrb[0].mxu0
        %476 = vdwg.mxu0
        %v477 = vld [vmem:[#allocation4] sm:$0xff]
        %479 = vset.pattern.permute.xlu0 0
        %480 = vperm.xlu0 %479, %v388
        %v481 = vpop.permute.xlu0 %480
        %v483 = vmul.f32 %v481, %v477
        %v484 = vadd.f32 %v483, %v474
        %485 = vst.msk [vmem:[#allocation4] sm:$0xff] %vm302, %v484
        %p486 = scmp.eq.s32.totalorder %s30, 1
        // Predicated region
        $region49: #{tpu_custom_call.1} parent=31 // pred_check
          %p487 = pneg %p486
        $region50: #{tpu_custom_call.1} parent=31 // pred_check_branch
          %489 = sbr.rel (%p487) target = $region52
        $region51: #{tpu_custom_call.1} parent=31 // pred_region
          %v490 = vld [vmem:[#allocation3] sm:$0xff]
          %v491 = vrcp.pop %v490
          %v492 = vld [vmem:[#allocation4] sm:$0xff]
          %494 = vset.pattern.permute.xlu0 0
          %495 = vperm.xlu0 %494, %v491
          %v496 = vpop.permute.xlu0 %495
          %v498 = vmul.f32 %v492, %v496
          %499 = vst.msk [vmem:[%s289] sm:$0xff] %vm302, %v498
        $region52: #{tpu_custom_call.1} parent=31 // pred_fallthru
          _
        %s500 = sand.u32 %s136, 1
        %s501 = scalar_lea.sflag [#allocation7], %s500
        %s502 = sand.u32 %s136, 1
        %s503 = smul.addr %s502, 8
        %s504 = scalar_lea.vmem [#allocation11], %s503
        // Predicated region
        $region53: #{tpu_custom_call.1} parent=31 // pred_check
          %p505 = pneg %p146
        $region54: #{tpu_custom_call.1} parent=31 // pred_check_branch
          %507 = sbr.rel (%p505) target = $region56
        $region55: #{tpu_custom_call.1} parent=31 // pred_region
          %s509 = ssub.s32 128, 128
          %510 = vsyncadd %s501, %s509
          %s511 = smul.addr %s28, 2
          %s512 = sadd.s32 %s29, %s511
          %s513 = smul.addr %s512, 128
          %s514 = scalar_lea.hbm %s3, %s513
          %s516 = sshll.u32 %s504, 4
          %s517 = int_to_ptr.vmem [resolvable:$true] %s516
          %519 = dma.vmem_to_hbm [thread:$0]  %s517, 128, %s514, %s501
        $region56: #{tpu_custom_call.1} parent=31 // pred_fallthru
          _
      $region32: #{tpu_custom_call.1} parent=5 // pred_fallthru
        _
      %p520 = scmp.le.s32.totalorder 2, %s18
      // Predicated region
      $region57: #{tpu_custom_call.1} parent=5 // pred_check
        %p521 = pneg %p520
      $region58: #{tpu_custom_call.1} parent=5 // pred_check_branch
        %523 = sbr.rel (%p521) target = $region60
      $region59: #{tpu_custom_call.1} parent=5 // pred_region
        %s524 = ssub.s32 %s18, 2
        // Predicated region
        $region61: #{tpu_custom_call.1} parent=59 // pred_check
          %p525 = pneg %p152
        $region62: #{tpu_custom_call.1} parent=59 // pred_check_branch
          %527 = sbr.rel (%p525) target = $region64
        $region63: #{tpu_custom_call.1} parent=59 // pred_region
          %s528 = sand.u32 %s137, 1
          %s529 = scalar_lea.sflag [#allocation7], %s528
          %s530 = sand.u32 %s137, 1
          %s531 = smul.addr %s530, 8
          %s532 = scalar_lea.vmem [#allocation11], %s531
          %533 = dma.done %s529, 128
        $region64: #{tpu_custom_call.1} parent=59 // pred_fallthru
          _
      $region60: #{tpu_custom_call.1} parent=5 // pred_fallthru
        _
    $region6: #{tpu_custom_call.1} parent=1 // loop_footer
      %s22 = sadd.s32 1, %s18
    $region7: #{tpu_custom_call.1} parent=1 // loop_footer_branch
      %17 = sbr.rel target = $region3
    $region8: #{tpu_custom_call.1} parent=1 // loop_exit
      _
    %534 = vsyncpa [#allocation6], 1
    %s535 = scalar_lea.sflag [#allocation6], 1
    %536 = vsyncpa %s535, 1
    %537 = vsyncpa [#allocation9], 1
    %s538 = scalar_lea.sflag [#allocation9], 1
    %539 = vsyncpa %s538, 1
    %540 = vsyncpa [#allocation7], 1
    %s541 = scalar_lea.sflag [#allocation7], 1
    %542 = vsyncpa %s541, 1

</llo_original>
